<compile_context>
chip_gen: v7x
topology: tpu7x:2x2x1
jax: 0.10.0
libtpu: 0.0.40
codegen_flags: <defaults>
</compile_context>

<pallas_src>
import jax
import jax.numpy as jnp
from jax.experimental import pallas as pl
from jax.experimental.pallas import tpu as pltpu


def _layernorm(x, gamma, beta, eps=1e-5):
    # PyTorch LayerNorm semantics (biased variance, eps inside the sqrt),
    # computed single-pass: the two lane reductions are independent XLU ops.
    # Stats stay in f32 (cancellation in E[x^2]-mean^2 is harmless there).
    mean = jnp.mean(x, axis=-1, keepdims=True)
    mean_sq = jnp.mean(x * x, axis=-1, keepdims=True)
    var = mean_sq - mean * mean
    inv = jax.lax.rsqrt(var + eps)
    return (x - mean) * inv * gamma + beta


def q_critic_kernel(sa_ref, w1_ref, lnp1_ref, w2s_ref, w2a_ref, lnp2_ref,
                    w3_ref, lnp3_ref, w4_ref, b4_ref, q_ref):
    # sa = [state | action] rows, already bf16.  Matmuls accumulate in f32;
    # all elementwise (bias / LN / ReLU) math is f32.
    sa = sa_ref[...]

    # l1 -> ln1 -> relu   (w1 zero-padded over the action rows)
    lnp1 = lnp1_ref[...]
    h = jnp.dot(sa, w1_ref[...], preferred_element_type=jnp.float32) + lnp1[0:1, :]
    h = jnp.maximum(_layernorm(h, lnp1[1:2, :], lnp1[2:3, :]), 0.0)

    # l2 over cat([h, action]) -> ln2 -> relu
    # cat([h, a]) @ W2 == h @ W2[:W] + [s|a] @ W2a_pad  (state rows of W2a_pad are 0)
    lnp2 = lnp2_ref[...]
    h = (jnp.dot(h.astype(jnp.bfloat16), w2s_ref[...], preferred_element_type=jnp.float32)
         + jnp.dot(sa, w2a_ref[...], preferred_element_type=jnp.float32)
         + lnp2[0:1, :])
    h = jnp.maximum(_layernorm(h, lnp2[1:2, :], lnp2[2:3, :]), 0.0)

    # l3 -> ln3 -> relu
    lnp3 = lnp3_ref[...]
    h = jnp.dot(h.astype(jnp.bfloat16), w3_ref[...], preferred_element_type=jnp.float32) + lnp3[0:1, :]
    h = jnp.maximum(_layernorm(h, lnp3[1:2, :], lnp3[2:3, :]), 0.0)

    # l4 head, transposed: (1, W3) . (block_b, W3)^T -> (1, block_b).
    # Output row is lane-dense so the store is a single unmasked vst.
    q_row = jax.lax.dot_general(
        w4_ref[...], h.astype(jnp.bfloat16),
        dimension_numbers=(((1,), (1,)), ((), ())),
        preferred_element_type=jnp.float32)
    q_ref[...] = (q_row + b4_ref[0]).astype(q_ref.dtype)


def _choose_block_b(batch):
    """Batch tile.  Small/medium B: one grid step (no ~0.35us/step overhead on
    single-TC v5e/v6e), rounded to 16 for bf16 sublane packing.  Large B:
    128-multiple tiles up to 512, keeping >= 2 blocks so the parallel grid
    axis can feed both v7x TensorCores."""
    if batch <= 512:
        return max(16, ((batch + 15) // 16) * 16)
    blk = min(512, (batch // 2) // 128 * 128)
    return max(blk, 128)


def q_critic_forward(state, action, kp, *, block_b=None):
    B, sd = state.shape
    _, ad = action.shape
    W = kp["w1p"].shape[1]
    W2 = kp["w2s"].shape[1]
    W3 = kp["w3"].shape[1]

    if block_b is None:
        block_b = _choose_block_b(B)
    n_blocks = pl.cdiv(B, block_b)
    Bp = n_blocks * block_b
    if n_blocks > 1:
        # Lane-dense (1, block_b) output tile needs a 128-multiple block.
        assert block_b % 128 == 0, "block_b must be a multiple of 128 when tiled"

    # bf16 input: halves the input HBM read; matmuls consume bf16 anyway.
    sa = jnp.concatenate([state, action], axis=-1).astype(jnp.bfloat16)
    if Bp != B:
        sa = jnp.pad(sa, ((0, Bp - B), (0, 0)))  # zero rows, sliced off below

    # Weight footprint (bf16); only matters when net_width is scaled way up.
    w_elems = (sd + ad) * W + W * W2 + (sd + ad) * W2 + W2 * W3 + W3
    weight_bytes = 2 * w_elems
    big_weights = weight_bytes > (8 << 20)

    def const_spec(shape):
        # Grid-invariant parameter: DMA'd once (constant index map).  For big
        # weight sets, single-buffer to halve their VMEM footprint (v7x: 64 MiB).
        if big_weights:
            return pl.BlockSpec(shape, lambda i: (0, 0), pipeline_mode=pl.Buffered(1))
        return pl.BlockSpec(shape, lambda i: (0, 0))

    in_specs = [
        pl.BlockSpec((block_b, sd + ad), lambda i: (i, 0)),   # [state|action] tile, bf16
        const_spec((sd + ad, W)),                             # w1 (action rows = 0), bf16
        const_spec((3, W)),                                   # b1 / gamma1 / beta1, f32
        const_spec((W, W2)),                                  # w2 state-half, bf16
        const_spec((sd + ad, W2)),                            # w2 action-half (state rows = 0), bf16
        const_spec((3, W2)),                                  # b2 / gamma2 / beta2, f32
        const_spec((W2, W3)),                                 # w3, bf16
        const_spec((3, W3)),                                  # b3 / gamma3 / beta3, f32
        const_spec((1, W3)),                                  # w4 as a row vector, bf16
        pl.BlockSpec(memory_space=pltpu.MemorySpace.SMEM),    # b4 scalar in SMEM
    ]
    # Transposed scalar output: (1, Bp), each grid step writes (1, block_b).
    out_spec = pl.BlockSpec((1, block_b), lambda i: (0, i))

    grid_spec = pltpu.PrefetchScalarGridSpec(
        num_scalar_prefetch=0,
        grid=(n_blocks,),
        in_specs=in_specs,
        out_specs=out_spec,
    )

    vmem_limit = None
    if big_weights:
        vmem_limit = min(weight_bytes + (8 << 20), 64 << 20)

    out = pl.pallas_call(
        q_critic_kernel,
        out_shape=jax.ShapeDtypeStruct((1, Bp), jnp.float32),
        grid_spec=grid_spec,
        compiler_params=pltpu.CompilerParams(
            dimension_semantics=("parallel",),
            vmem_limit_bytes=vmem_limit,
        ),
    )(sa, kp["w1p"], kp["lnp1"], kp["w2s"], kp["w2ap"], kp["lnp2"],
      kp["w3"], kp["lnp3"], kp["w4r"], kp["b4"])

    return out[0, :B].reshape(B, 1)


def init_params(key, state_dim, action_dim, net_width):
    """f32 'module-layout' params; Linear weights stored as (in_features, out_features)."""
    W, W2, W3 = net_width, net_width // 2, net_width // 4
    ks = jax.random.split(key, 4)

    def lin(k, fan_in, fan_out):
        scale = 1.0 / jnp.sqrt(fan_in)
        w = jax.random.uniform(k, (fan_in, fan_out), jnp.float32, -scale, scale)
        b = jax.random.uniform(jax.random.fold_in(k, 1), (1, fan_out),
                               jnp.float32, -scale, scale)
        return w, b

    w1, b1 = lin(ks[0], state_dim, W)
    w2, b2 = lin(ks[1], W + action_dim, W2)
    w3, b3 = lin(ks[2], W2, W3)
    w4, b4 = lin(ks[3], W3, 1)
    ones = lambda n: jnp.ones((1, n), jnp.float32)
    zeros = lambda n: jnp.zeros((1, n), jnp.float32)
    return dict(w1=w1, b1=b1, g1=ones(W), be1=zeros(W),
                w2=w2, b2=b2, g2=ones(W2), be2=zeros(W2),
                w3=w3, b3=b3, g3=ones(W3), be3=zeros(W3),
                w4=w4, b4=b4)


def pack_params(p, state_dim, action_dim):
    """Convert module-layout params to the kernel layout (bf16 weights, packed LN params)."""
    W = p["w1"].shape[1]
    W2 = p["w2"].shape[1]
    sd, ad = state_dim, action_dim

    w1p = jnp.zeros((sd + ad, W), jnp.float32).at[:sd, :].set(p["w1"])
    w2ap = jnp.zeros((sd + ad, W2), jnp.float32).at[sd:, :].set(p["w2"][W:, :])

    stack = lambda b, g, be: jnp.concatenate([b, g, be], axis=0)  # (3, feat) f32

    return dict(
        w1p=w1p.astype(jnp.bfloat16),
        lnp1=stack(p["b1"], p["g1"], p["be1"]),
        w2s=p["w2"][:W, :].astype(jnp.bfloat16),
        w2ap=w2ap.astype(jnp.bfloat16),
        lnp2=stack(p["b2"], p["g2"], p["be2"]),
        w3=p["w3"].astype(jnp.bfloat16),
        lnp3=stack(p["b3"], p["g3"], p["be3"]),
        w4r=p["w4"].T.astype(jnp.bfloat16),   # (1, W3) row vector for the NT head matmul
        b4=p["b4"].reshape(1),
    )


def q_critic_reference(state, action, p):
    """Pure-JAX reference mirroring the PyTorch forward (bf16 matmul operands like the kernel)."""
    def ln(x, g, b, eps=1e-5):
        mean = jnp.mean(x, axis=-1, keepdims=True)
        var = jnp.mean(jnp.square(x - mean), axis=-1, keepdims=True)
        return (x - mean) * jax.lax.rsqrt(var + eps) * g + b

    def mm(x, w):
        return jnp.dot(x.astype(jnp.bfloat16), w.astype(jnp.bfloat16),
                       preferred_element_type=jnp.float32)

    h = mm(state, p["w1"]) + p["b1"]
    h = jnp.maximum(ln(h, p["g1"], p["be1"]), 0.0)
    x = jnp.concatenate([h, action], axis=-1)
    h = mm(x, p["w2"]) + p["b2"]
    h = jnp.maximum(ln(h, p["g2"], p["be2"]), 0.0)
    h = mm(h, p["w3"]) + p["b3"]
    h = jnp.maximum(ln(h, p["g3"], p["be3"]), 0.0)
    return mm(h, p["w4"]) + p["b4"]


if __name__ == "__main__":
    # Small shapes consistent with the module's forward.
    B, state_dim, action_dim, net_width = 32, 16, 8, 128

    key = jax.random.PRNGKey(0)
    k_s, k_a, k_p = jax.random.split(key, 3)
    state = jax.random.normal(k_s, (B, state_dim), jnp.float32)
    action = jax.random.normal(k_a, (B, action_dim), jnp.float32)

    params = init_params(k_p, state_dim, action_dim, net_width)
    kparams = pack_params(params, state_dim, action_dim)

    q = q_critic_forward(state, action, kparams)
    q = jax.block_until_ready(q)

    q_ref = q_critic_reference(state, action, params)
    assert q.shape == (B, 1)
    assert jnp.allclose(q, q_ref, atol=1e-3, rtol=1e-3), "mismatch vs. JAX reference"

    print("KERNEL_OK")
</pallas_src>

<mosaic_0001>
module attributes {stable_mosaic.version = 11 : i64} {
  func.func @q_critic_kernel(%arg0: i32, %arg1: memref<32x24xbf16, #tpu.memory_space<vmem>>, %arg2: memref<24x128xbf16, #tpu.memory_space<vmem>>, %arg3: memref<3x128xf32, #tpu.memory_space<vmem>>, %arg4: memref<128x64xbf16, #tpu.memory_space<vmem>>, %arg5: memref<24x64xbf16, #tpu.memory_space<vmem>>, %arg6: memref<3x64xf32, #tpu.memory_space<vmem>>, %arg7: memref<64x32xbf16, #tpu.memory_space<vmem>>, %arg8: memref<3x32xf32, #tpu.memory_space<vmem>>, %arg9: memref<1x32xbf16, #tpu.memory_space<vmem>>, %arg10: memref<1xf32, #tpu.memory_space<smem>>, %arg11: memref<1x32xf32, #tpu.memory_space<vmem>>) attributes {dimension_semantics = [#tpu.dimension_semantics<parallel>], iteration_bounds = array<i64: 1>, scalar_prefetch = 0 : i64, scratch_operands = 0 : i64, tpu.core_type = #tpu.core_type<tc>, window_params = [{transform_indices = @transform_0, window_bounds = array<i64: 32, 24>}, {pipeline_mode = #tpu.pipeline_mode<synchronous>, transform_indices = @transform_1, window_bounds = array<i64: 24, 128>}, {pipeline_mode = #tpu.pipeline_mode<synchronous>, transform_indices = @transform_2, window_bounds = array<i64: 3, 128>}, {pipeline_mode = #tpu.pipeline_mode<synchronous>, transform_indices = @transform_3, window_bounds = array<i64: 128, 64>}, {pipeline_mode = #tpu.pipeline_mode<synchronous>, transform_indices = @transform_4, window_bounds = array<i64: 24, 64>}, {pipeline_mode = #tpu.pipeline_mode<synchronous>, transform_indices = @transform_5, window_bounds = array<i64: 3, 64>}, {pipeline_mode = #tpu.pipeline_mode<synchronous>, transform_indices = @transform_6, window_bounds = array<i64: 64, 32>}, {pipeline_mode = #tpu.pipeline_mode<synchronous>, transform_indices = @transform_7, window_bounds = array<i64: 3, 32>}, {pipeline_mode = #tpu.pipeline_mode<synchronous>, transform_indices = @transform_8, window_bounds = array<i64: 1, 32>}, {transform_indices = @transform_9, window_bounds = array<i64: 1>}, {transform_indices = @transform_10, window_bounds = array<i64: 1, 32>}]} {
    %c0 = arith.constant 0 : index
    %c0_0 = arith.constant 0 : index
    %0 = vector.load %arg1[%c0, %c0_0] : memref<32x24xbf16, #tpu.memory_space<vmem>>, vector<32x24xbf16>
    %c0_1 = arith.constant 0 : index
    %c0_2 = arith.constant 0 : index
    %1 = vector.load %arg3[%c0_1, %c0_2] : memref<3x128xf32, #tpu.memory_space<vmem>>, vector<3x128xf32>
    %c0_3 = arith.constant 0 : index
    %c0_4 = arith.constant 0 : index
    %2 = vector.load %arg2[%c0_3, %c0_4] : memref<24x128xbf16, #tpu.memory_space<vmem>>, vector<24x128xbf16>
    %cst = arith.constant dense<0.000000e+00> : vector<32x128xf32>
    %3 = tpu.matmul %0, %2, %cst {dimension_numbers = #tpu.dot_dimension_numbers<[1], [0], [0], [1], [0, 0, 1, 1], [], []>} : vector<32x24xbf16>, vector<24x128xbf16>, vector<32x128xf32> -> vector<32x128xf32>
    %4 = vector.extract_strided_slice %1 {offsets = [0, 0], sizes = [1, 128], strides = [1, 1]} : vector<3x128xf32> to vector<1x128xf32>
    %5 = vector.broadcast %4 : vector<1x128xf32> to vector<32x128xf32>
    %6 = arith.addf %3, %5 : vector<32x128xf32>
    %7 = vector.extract_strided_slice %1 {offsets = [1, 0], sizes = [1, 128], strides = [1, 1]} : vector<3x128xf32> to vector<1x128xf32>
    %8 = vector.extract_strided_slice %1 {offsets = [2, 0], sizes = [1, 128], strides = [1, 1]} : vector<3x128xf32> to vector<1x128xf32>
    %cst_5 = arith.constant dense<0.000000e+00> : vector<32xf32>
    %9 = vector.multi_reduction <add>, %6, %cst_5 [1] : vector<32x128xf32> to vector<32xf32>
    %10 = vector.shape_cast %9 : vector<32xf32> to vector<32x1xf32>
    %cst_6 = arith.constant 1.280000e+02 : f32
    %11 = vector.broadcast %cst_6 : f32 to vector<32x1xf32>
    %12 = arith.divf %10, %11 : vector<32x1xf32>
    %13 = arith.mulf %6, %6 : vector<32x128xf32>
    %cst_7 = arith.constant dense<0.000000e+00> : vector<32xf32>
    %14 = vector.multi_reduction <add>, %13, %cst_7 [1] : vector<32x128xf32> to vector<32xf32>
    %15 = vector.shape_cast %14 : vector<32xf32> to vector<32x1xf32>
    %cst_8 = arith.constant 1.280000e+02 : f32
    %16 = vector.broadcast %cst_8 : f32 to vector<32x1xf32>
    %17 = arith.divf %15, %16 : vector<32x1xf32>
    %18 = arith.mulf %12, %12 : vector<32x1xf32>
    %19 = arith.subf %17, %18 : vector<32x1xf32>
    %cst_9 = arith.constant 9.99999974E-6 : f32
    %20 = vector.broadcast %cst_9 : f32 to vector<32x1xf32>
    %21 = arith.addf %19, %20 : vector<32x1xf32>
    %22 = math.rsqrt %21 : vector<32x1xf32>
    %23 = vector.broadcast %12 : vector<32x1xf32> to vector<32x128xf32>
    %24 = arith.subf %6, %23 : vector<32x128xf32>
    %25 = vector.broadcast %22 : vector<32x1xf32> to vector<32x128xf32>
    %26 = arith.mulf %24, %25 : vector<32x128xf32>
    %27 = vector.broadcast %7 : vector<1x128xf32> to vector<32x128xf32>
    %28 = arith.mulf %26, %27 : vector<32x128xf32>
    %29 = vector.broadcast %8 : vector<1x128xf32> to vector<32x128xf32>
    %30 = arith.addf %28, %29 : vector<32x128xf32>
    %cst_10 = arith.constant 0.000000e+00 : f32
    %31 = vector.broadcast %cst_10 : f32 to vector<32x128xf32>
    %32 = arith.maximumf %30, %31 : vector<32x128xf32>
    %c0_11 = arith.constant 0 : index
    %c0_12 = arith.constant 0 : index
    %33 = vector.load %arg6[%c0_11, %c0_12] : memref<3x64xf32, #tpu.memory_space<vmem>>, vector<3x64xf32>
    %34 = arith.truncf %32 : vector<32x128xf32> to vector<32x128xbf16>
    %c0_13 = arith.constant 0 : index
    %c0_14 = arith.constant 0 : index
    %35 = vector.load %arg4[%c0_13, %c0_14] : memref<128x64xbf16, #tpu.memory_space<vmem>>, vector<128x64xbf16>
    %cst_15 = arith.constant dense<0.000000e+00> : vector<32x64xf32>
    %36 = tpu.matmul %34, %35, %cst_15 {dimension_numbers = #tpu.dot_dimension_numbers<[1], [0], [0], [1], [0, 0, 1, 1], [], []>} : vector<32x128xbf16>, vector<128x64xbf16>, vector<32x64xf32> -> vector<32x64xf32>
    %c0_16 = arith.constant 0 : index
    %c0_17 = arith.constant 0 : index
    %37 = vector.load %arg5[%c0_16, %c0_17] : memref<24x64xbf16, #tpu.memory_space<vmem>>, vector<24x64xbf16>
    %cst_18 = arith.constant dense<0.000000e+00> : vector<32x64xf32>
    %38 = tpu.matmul %0, %37, %cst_18 {dimension_numbers = #tpu.dot_dimension_numbers<[1], [0], [0], [1], [0, 0, 1, 1], [], []>} : vector<32x24xbf16>, vector<24x64xbf16>, vector<32x64xf32> -> vector<32x64xf32>
    %39 = arith.addf %36, %38 : vector<32x64xf32>
    %40 = vector.extract_strided_slice %33 {offsets = [0, 0], sizes = [1, 64], strides = [1, 1]} : vector<3x64xf32> to vector<1x64xf32>
    %41 = vector.broadcast %40 : vector<1x64xf32> to vector<32x64xf32>
    %42 = arith.addf %39, %41 : vector<32x64xf32>
    %43 = vector.extract_strided_slice %33 {offsets = [1, 0], sizes = [1, 64], strides = [1, 1]} : vector<3x64xf32> to vector<1x64xf32>
    %44 = vector.extract_strided_slice %33 {offsets = [2, 0], sizes = [1, 64], strides = [1, 1]} : vector<3x64xf32> to vector<1x64xf32>
    %cst_19 = arith.constant dense<0.000000e+00> : vector<32xf32>
    %45 = vector.multi_reduction <add>, %42, %cst_19 [1] : vector<32x64xf32> to vector<32xf32>
    %46 = vector.shape_cast %45 : vector<32xf32> to vector<32x1xf32>
    %cst_20 = arith.constant 6.400000e+01 : f32
    %47 = vector.broadcast %cst_20 : f32 to vector<32x1xf32>
    %48 = arith.divf %46, %47 : vector<32x1xf32>
    %49 = arith.mulf %42, %42 : vector<32x64xf32>
    %cst_21 = arith.constant dense<0.000000e+00> : vector<32xf32>
    %50 = vector.multi_reduction <add>, %49, %cst_21 [1] : vector<32x64xf32> to vector<32xf32>
    %51 = vector.shape_cast %50 : vector<32xf32> to vector<32x1xf32>
    %cst_22 = arith.constant 6.400000e+01 : f32
    %52 = vector.broadcast %cst_22 : f32 to vector<32x1xf32>
    %53 = arith.divf %51, %52 : vector<32x1xf32>
    %54 = arith.mulf %48, %48 : vector<32x1xf32>
    %55 = arith.subf %53, %54 : vector<32x1xf32>
    %cst_23 = arith.constant 9.99999974E-6 : f32
    %56 = vector.broadcast %cst_23 : f32 to vector<32x1xf32>
    %57 = arith.addf %55, %56 : vector<32x1xf32>
    %58 = math.rsqrt %57 : vector<32x1xf32>
    %59 = vector.broadcast %48 : vector<32x1xf32> to vector<32x64xf32>
    %60 = arith.subf %42, %59 : vector<32x64xf32>
    %61 = vector.broadcast %58 : vector<32x1xf32> to vector<32x64xf32>
    %62 = arith.mulf %60, %61 : vector<32x64xf32>
    %63 = vector.broadcast %43 : vector<1x64xf32> to vector<32x64xf32>
    %64 = arith.mulf %62, %63 : vector<32x64xf32>
    %65 = vector.broadcast %44 : vector<1x64xf32> to vector<32x64xf32>
    %66 = arith.addf %64, %65 : vector<32x64xf32>
    %cst_24 = arith.constant 0.000000e+00 : f32
    %67 = vector.broadcast %cst_24 : f32 to vector<32x64xf32>
    %68 = arith.maximumf %66, %67 : vector<32x64xf32>
    %c0_25 = arith.constant 0 : index
    %c0_26 = arith.constant 0 : index
    %69 = vector.load %arg8[%c0_25, %c0_26] : memref<3x32xf32, #tpu.memory_space<vmem>>, vector<3x32xf32>
    %70 = arith.truncf %68 : vector<32x64xf32> to vector<32x64xbf16>
    %c0_27 = arith.constant 0 : index
    %c0_28 = arith.constant 0 : index
    %71 = vector.load %arg7[%c0_27, %c0_28] : memref<64x32xbf16, #tpu.memory_space<vmem>>, vector<64x32xbf16>
    %cst_29 = arith.constant dense<0.000000e+00> : vector<32x32xf32>
    %72 = tpu.matmul %70, %71, %cst_29 {dimension_numbers = #tpu.dot_dimension_numbers<[1], [0], [0], [1], [0, 0, 1, 1], [], []>} : vector<32x64xbf16>, vector<64x32xbf16>, vector<32x32xf32> -> vector<32x32xf32>
    %73 = vector.extract_strided_slice %69 {offsets = [0, 0], sizes = [1, 32], strides = [1, 1]} : vector<3x32xf32> to vector<1x32xf32>
    %74 = vector.broadcast %73 : vector<1x32xf32> to vector<32x32xf32>
    %75 = arith.addf %72, %74 : vector<32x32xf32>
    %76 = vector.extract_strided_slice %69 {offsets = [1, 0], sizes = [1, 32], strides = [1, 1]} : vector<3x32xf32> to vector<1x32xf32>
    %77 = vector.extract_strided_slice %69 {offsets = [2, 0], sizes = [1, 32], strides = [1, 1]} : vector<3x32xf32> to vector<1x32xf32>
    %cst_30 = arith.constant dense<0.000000e+00> : vector<32xf32>
    %78 = vector.multi_reduction <add>, %75, %cst_30 [1] : vector<32x32xf32> to vector<32xf32>
    %79 = vector.shape_cast %78 : vector<32xf32> to vector<32x1xf32>
    %cst_31 = arith.constant 3.200000e+01 : f32
    %80 = vector.broadcast %cst_31 : f32 to vector<32x1xf32>
    %81 = arith.divf %79, %80 : vector<32x1xf32>
    %82 = arith.mulf %75, %75 : vector<32x32xf32>
    %cst_32 = arith.constant dense<0.000000e+00> : vector<32xf32>
    %83 = vector.multi_reduction <add>, %82, %cst_32 [1] : vector<32x32xf32> to vector<32xf32>
    %84 = vector.shape_cast %83 : vector<32xf32> to vector<32x1xf32>
    %cst_33 = arith.constant 3.200000e+01 : f32
    %85 = vector.broadcast %cst_33 : f32 to vector<32x1xf32>
    %86 = arith.divf %84, %85 : vector<32x1xf32>
    %87 = arith.mulf %81, %81 : vector<32x1xf32>
    %88 = arith.subf %86, %87 : vector<32x1xf32>
    %cst_34 = arith.constant 9.99999974E-6 : f32
    %89 = vector.broadcast %cst_34 : f32 to vector<32x1xf32>
    %90 = arith.addf %88, %89 : vector<32x1xf32>
    %91 = math.rsqrt %90 : vector<32x1xf32>
    %92 = vector.broadcast %81 : vector<32x1xf32> to vector<32x32xf32>
    %93 = arith.subf %75, %92 : vector<32x32xf32>
    %94 = vector.broadcast %91 : vector<32x1xf32> to vector<32x32xf32>
    %95 = arith.mulf %93, %94 : vector<32x32xf32>
    %96 = vector.broadcast %76 : vector<1x32xf32> to vector<32x32xf32>
    %97 = arith.mulf %95, %96 : vector<32x32xf32>
    %98 = vector.broadcast %77 : vector<1x32xf32> to vector<32x32xf32>
    %99 = arith.addf %97, %98 : vector<32x32xf32>
    %cst_35 = arith.constant 0.000000e+00 : f32
    %100 = vector.broadcast %cst_35 : f32 to vector<32x32xf32>
    %101 = arith.maximumf %99, %100 : vector<32x32xf32>
    %c0_36 = arith.constant 0 : index
    %c0_37 = arith.constant 0 : index
    %102 = vector.load %arg9[%c0_36, %c0_37] : memref<1x32xbf16, #tpu.memory_space<vmem>>, vector<1x32xbf16>
    %103 = arith.truncf %101 : vector<32x32xf32> to vector<32x32xbf16>
    %cst_38 = arith.constant dense<0.000000e+00> : vector<1x32xf32>
    %104 = tpu.matmul %102, %103, %cst_38 {dimension_numbers = #tpu.dot_dimension_numbers<[1], [1], [0], [0], [0, 0, 1, 0], [], []>} : vector<1x32xbf16>, vector<32x32xbf16>, vector<1x32xf32> -> vector<1x32xf32>
    %c0_39 = arith.constant 0 : index
    %105 = memref.load %arg10[%c0_39] : memref<1xf32, #tpu.memory_space<smem>>
    %106 = vector.broadcast %105 : f32 to vector<1x32xf32>
    %107 = arith.addf %104, %106 : vector<1x32xf32>
    %c0_40 = arith.constant 0 : index
    %c0_41 = arith.constant 0 : index
    %108 = vector.load %arg11[%c0_40, %c0_41] : memref<1x32xf32, #tpu.memory_space<vmem>>, vector<1x32xf32>
    tpu.vector_store %arg11[%c0_40, %c0_41], %107 {strides = array<i32>} : memref<1x32xf32, #tpu.memory_space<vmem>>, vector<1x32xf32>,
    return
  }
  func.func @transform_0(%arg0: i32) -> (i32, i32) {
    %c0_i32 = arith.constant 0 : i32
    %c0_i32_0 = arith.constant 0 : i32
    return %arg0, %c0_i32 : i32, i32
  }
  func.func @transform_1(%arg0: i32) -> (i32, i32) {
    %c0_i32 = arith.constant 0 : i32
    %c0_i32_0 = arith.constant 0 : i32
    %c0_i32_1 = arith.constant 0 : i32
    return %c0_i32, %c0_i32_0 : i32, i32
  }
  func.func @transform_2(%arg0: i32) -> (i32, i32) {
    %c0_i32 = arith.constant 0 : i32
    %c0_i32_0 = arith.constant 0 : i32
    %c0_i32_1 = arith.constant 0 : i32
    return %c0_i32, %c0_i32_0 : i32, i32
  }
  func.func @transform_3(%arg0: i32) -> (i32, i32) {
    %c0_i32 = arith.constant 0 : i32
    %c0_i32_0 = arith.constant 0 : i32
    %c0_i32_1 = arith.constant 0 : i32
    return %c0_i32, %c0_i32_0 : i32, i32
  }
  func.func @transform_4(%arg0: i32) -> (i32, i32) {
    %c0_i32 = arith.constant 0 : i32
    %c0_i32_0 = arith.constant 0 : i32
    %c0_i32_1 = arith.constant 0 : i32
    return %c0_i32, %c0_i32_0 : i32, i32
  }
  func.func @transform_5(%arg0: i32) -> (i32, i32) {
    %c0_i32 = arith.constant 0 : i32
    %c0_i32_0 = arith.constant 0 : i32
    %c0_i32_1 = arith.constant 0 : i32
    return %c0_i32, %c0_i32_0 : i32, i32
  }
  func.func @transform_6(%arg0: i32) -> (i32, i32) {
    %c0_i32 = arith.constant 0 : i32
    %c0_i32_0 = arith.constant 0 : i32
    %c0_i32_1 = arith.constant 0 : i32
    return %c0_i32, %c0_i32_0 : i32, i32
  }
  func.func @transform_7(%arg0: i32) -> (i32, i32) {
    %c0_i32 = arith.constant 0 : i32
    %c0_i32_0 = arith.constant 0 : i32
    %c0_i32_1 = arith.constant 0 : i32
    return %c0_i32, %c0_i32_0 : i32, i32
  }
  func.func @transform_8(%arg0: i32) -> (i32, i32) {
    %c0_i32 = arith.constant 0 : i32
    %c0_i32_0 = arith.constant 0 : i32
    %c0_i32_1 = arith.constant 0 : i32
    return %c0_i32, %c0_i32_0 : i32, i32
  }
  func.func @transform_9(%arg0: i32) -> i32 {
    %c0_i32 = arith.constant 0 : i32
    %c0_i32_0 = arith.constant 0 : i32
    return %c0_i32 : i32
  }
  func.func @transform_10(%arg0: i32) -> (i32, i32) {
    %c0_i32 = arith.constant 0 : i32
    %c0_i32_0 = arith.constant 0 : i32
    return %c0_i32, %arg0 : i32, i32
  }
}

</mosaic_0001>

<llo_original>
// kernel: tpu_custom_call.1
$region0: #{tpu_custom_call.1}
  #allocation0 [shape = 'u32[]', space=smem, size = 0x4, offset = 0x4, fixed_abs, tag = 'smem constant byte address 0x4 - core index']
  #allocation1 [shape = 'u32[144,128]{1,0:T(1,128)}', space=vmem, size = 0x12000, scoped, tag = 'internal scratch']
  #allocation2 [shape = 'f32[1]{0:T(128)S(6)}', space=smem, size = 0x200, scoped, tag = 'scoped memory for tpu_custom_call.1']
  %s0 = inlined_call_operand.vmem [shape: bf16[32,24], index: 0, kind: input, shape index: {}]
  %s1 = inlined_call_operand.vmem [shape: bf16[24,128], index: 1, kind: input, shape index: {}]
  %s2 = inlined_call_operand.vmem [shape: f32[3,128], index: 2, kind: input, shape index: {}]
  %s3 = inlined_call_operand.vmem [shape: bf16[128,64], index: 3, kind: input, shape index: {}]
  %s4 = inlined_call_operand.vmem [shape: bf16[24,64], index: 4, kind: input, shape index: {}]
  %s5 = inlined_call_operand.vmem [shape: f32[3,64], index: 5, kind: input, shape index: {}]
  %s6 = inlined_call_operand.vmem [shape: bf16[64,32], index: 6, kind: input, shape index: {}]
  %s7 = inlined_call_operand.vmem [shape: f32[3,32], index: 7, kind: input, shape index: {}]
  %s8 = inlined_call_operand.vmem [shape: bf16[1,32], index: 8, kind: input, shape index: {}]
  %s9 = inlined_call_operand.<no memory space> [shape: f32[1], index: 9, kind: input, shape index: {}]
  %s10 = inlined_call_operand.hbm [shape: f32[1,32], index: 10, kind: output, shape index: {}]
  %s11 = sld [smem:[#allocation0]]
  $region50: #{tpu_custom_call.1} parent=0
    _
  %s13 = ssub.s32 1, %s11
  %s14 = scalar_select 0, %s13, %s11
  %15 = sst [smem:[#allocation2]] %s9
  $region1: #{tpu_custom_call.1} parent=0
    #allocation3 [shape = 'u8[512]{0}', space=vmem, size = 0x400, scoped, tag = 'output window, operand 0, single buffered']
    #allocation4 [shape = 's32[1]{0}', space=sflag, size = 0x4, scoped, tag = 'scoped memory for tpu_custom_call.1']
    %16 = vsyncpa [#allocation4], 0
    // Predicated region
    $region2: #{tpu_custom_call.1} parent=1 // pred_check
      _
    $region3: #{tpu_custom_call.1} parent=1 // pred_check_branch
      %18 = sbr.rel (0) target = $region5
    $region4: #{tpu_custom_call.1} parent=1 // pred_region
      _
    $region5: #{tpu_custom_call.1} parent=1 // pred_fallthru
      _
    // Predicated region
    $region6: #{tpu_custom_call.1} parent=1 // pred_check
      _
    $region7: #{tpu_custom_call.1} parent=1 // pred_check_branch
      %20 = sbr.rel (0) target = $region9
    $region8: #{tpu_custom_call.1} parent=1 // pred_region
      _
    $region9: #{tpu_custom_call.1} parent=1 // pred_fallthru
      _
    // Predicated region
    $region10: #{tpu_custom_call.1} parent=1 // pred_check
      _
    $region11: #{tpu_custom_call.1} parent=1 // pred_check_branch
      %22 = sbr.rel (0) target = $region13
    $region12: #{tpu_custom_call.1} parent=1 // pred_region
      _
    $region13: #{tpu_custom_call.1} parent=1 // pred_fallthru
      _
    // Predicated region
    $region14: #{tpu_custom_call.1} parent=1 // pred_check
      _
    $region15: #{tpu_custom_call.1} parent=1 // pred_check_branch
      %24 = sbr.rel (0) target = $region17
    $region16: #{tpu_custom_call.1} parent=1 // pred_region
      _
    $region17: #{tpu_custom_call.1} parent=1 // pred_fallthru
      _
    // Predicated region
    $region18: #{tpu_custom_call.1} parent=1 // pred_check
      _
    $region19: #{tpu_custom_call.1} parent=1 // pred_check_branch
      %26 = sbr.rel (0) target = $region21
    $region20: #{tpu_custom_call.1} parent=1 // pred_region
      _
    $region21: #{tpu_custom_call.1} parent=1 // pred_fallthru
      _
    // Predicated region
    $region22: #{tpu_custom_call.1} parent=1 // pred_check
      _
    $region23: #{tpu_custom_call.1} parent=1 // pred_check_branch
      %28 = sbr.rel (0) target = $region25
    $region24: #{tpu_custom_call.1} parent=1 // pred_region
      _
    $region25: #{tpu_custom_call.1} parent=1 // pred_fallthru
      _
    // Predicated region
    $region26: #{tpu_custom_call.1} parent=1 // pred_check
      _
    $region27: #{tpu_custom_call.1} parent=1 // pred_check_branch
      %30 = sbr.rel (0) target = $region29
    $region28: #{tpu_custom_call.1} parent=1 // pred_region
      _
    $region29: #{tpu_custom_call.1} parent=1 // pred_fallthru
      _
    // Predicated region
    $region30: #{tpu_custom_call.1} parent=1 // pred_check
      _
    $region31: #{tpu_custom_call.1} parent=1 // pred_check_branch
      %32 = sbr.rel (0) target = $region33
    $region32: #{tpu_custom_call.1} parent=1 // pred_region
      _
    $region33: #{tpu_custom_call.1} parent=1 // pred_fallthru
      _
    // Predicated region
    $region34: #{tpu_custom_call.1} parent=1 // pred_check
      _
    $region35: #{tpu_custom_call.1} parent=1 // pred_check_branch
      %34 = sbr.rel (0) target = $region37
    $region36: #{tpu_custom_call.1} parent=1 // pred_region
      _
    $region37: #{tpu_custom_call.1} parent=1 // pred_fallthru
      _
    // Predicated region
    $region38: #{tpu_custom_call.1} parent=1 // pred_check
      _
    $region39: #{tpu_custom_call.1} parent=1 // pred_check_branch
      %36 = sbr.rel (0) target = $region41
    $region40: #{tpu_custom_call.1} parent=1 // pred_region
      _
    $region41: #{tpu_custom_call.1} parent=1 // pred_fallthru
      _
    %v38 = vld [vmem:[%s0] sm:$0xf]
    %v39 = vld [vmem:[%s0 + $0x4] sm:$0xf]
    %v40 = vld [vmem:[%s0 + $0x8] sm:$0xf]
    %v41 = vld [vmem:[%s0 + $0xc] sm:$0xf]
    %v42 = vld [vmem:[%s2] sm:$0x7]
    %v43 = vld [vmem:[%s1] sm:$0xf]
    %v44 = vld [vmem:[%s1 + $0x4] sm:$0xf]
    %v45 = vld [vmem:[%s1 + $0x8] sm:$0xf]
    %v46 = vlaneseq
    %v47 = vshrl.u32 %v46, 7
    %v48 = vsub.s32 0, %v47
    %v49 = vrot.slane %v42, %v48
    %v54 = vunpack.c.l.b16 %v38
    %v55 = vunpack.c.l.b16 %v39
    %v56 = vunpack.c.l.b16 %v40
    %v57 = vunpack.c.l.b16 %v41
    %v58 = vpack.c.b16 %v55, %v54
    %v59 = vpack.c.b16 %v57, %v56
    %v63 = vunpack.c.l.b16 %v43
    %v64 = vunpack.c.l.b16 %v44
    %v65 = vunpack.c.l.b16 %v45
    %v66 = vpack.c.b16 %v64, %v63
    %v67 = vpack.c.b16 %v65, %v65
    %vm69 = vcmask 195584
    %v71 = vsel %vm69, %v58, 0
    %v74 = vsel %vm69, %v59, 0
    %vm76 = vcmask 1043456
    %v78 = vsel %vm76, %v67, 0
    %80 = vmatprep.subr.bf16.mxu0 0
    %81 = vmatpush1.bf16.msra.mxu0 %v66
    %82 = vmatprep.subr.bf16.mxu0 0
    %83 = vmatpush1.bf16.msra.mxu0 %v78
    %84 = vmatprep.subr.bf16.mxu0 0
    %85 = vmatpush1.bf16.msra.mxu0 0
    %86 = vmatprep.subr.bf16.mxu0 0
    %87 = vmatpush1.bf16.msra.mxu0 0
    %88 = vmatprep.subr.bf16.mxu0 0
    %89 = vmatpush1.bf16.msra.mxu0 0
    %90 = vmatprep.subr.bf16.mxu0 0
    %91 = vmatpush1.bf16.msra.mxu0 0
    %92 = vmatprep.subr.bf16.mxu0 0
    %93 = vmatpush1.bf16.msra.mxu0 0
    %94 = vmatprep.subr.bf16.mxu0 0
    %95 = vmatpush1.bf16.msra.mxu0 0
    %96 = vmatprep.subr.bf16.mxu0 0
    %97 = vmatpush1.bf16.msra.mxu0 0
    %98 = vmatprep.subr.bf16.mxu0 0
    %99 = vmatpush1.bf16.msra.mxu0 0
    %100 = vmatprep.subr.bf16.mxu0 0
    %101 = vmatpush1.bf16.msra.mxu0 0
    %102 = vmatprep.subr.bf16.mxu0 0
    %103 = vmatpush1.bf16.msra.mxu0 0
    %104 = vmatprep.subr.bf16.mxu0 0
    %105 = vmatpush1.bf16.msra.mxu0 0
    %106 = vmatprep.subr.bf16.mxu0 0
    %107 = vmatpush1.bf16.msra.mxu0 0
    %108 = vmatprep.subr.bf16.mxu0 0
    %109 = vmatpush1.bf16.msra.mxu0 0
    %110 = vmatprep.subr.bf16.mxu0 0
    %111 = vmatpush1.bf16.msra.mxu0 0
    %112 = vmatprep.mubr.bf16.mxu0 0
    %113 = vmatmul.mubr.bf16.gmra.mrb[0].mxu0 %v71
    %v114 = vpop.f32.mrb[0].mxu0
    %v115 = vadd.f32 %v49, %v114
    %v116 = vpop.f32.mrb[0].mxu0
    %v117 = vpop.f32.mrb[0].mxu0
    %v118 = vadd.f32 %v49, %v117
    %v119 = vpop.f32.mrb[0].mxu0
    %120 = vmatprep.mubr.bf16.mxu0 0
    %121 = vmatmul.mubr.bf16.gmra.mrb[0].mxu0 %v74
    %v122 = vpop.f32.mrb[0].mxu0
    %v123 = vadd.f32 %v49, %v122
    %v124 = vpop.f32.mrb[0].mxu0
    %v125 = vpop.f32.mrb[0].mxu0
    %v126 = vadd.f32 %v49, %v125
    %v127 = vpop.f32.mrb[0].mxu0
    %128 = vdwg.mxu0
    %129 = vadd.xlane.f32.xlu0 %v115
    %v130 = vpop.xlane.xlu0 %129
    %131 = vadd.xlane.f32.xlu0 %v118
    %v132 = vpop.xlane.xlu0 %131
    %133 = vadd.xlane.f32.xlu0 %v123
    %v134 = vpop.xlane.xlu0 %133
    %135 = vadd.xlane.f32.xlu0 %v126
    %v136 = vpop.xlane.xlu0 %135
    %v137 = vrcp.pop 128.0
    %v138 = vmul.f32 %v130, %v137
    %v139 = vmul.f32 %v132, %v137
    %v140 = vmul.f32 %v134, %v137
    %v141 = vmul.f32 %v136, %v137
    %v142 = vmul.f32 %v115, %v115
    %v143 = vmul.f32 %v118, %v118
    %v144 = vmul.f32 %v123, %v123
    %v145 = vmul.f32 %v126, %v126
    %146 = vadd.xlane.f32.xlu0 %v142
    %v147 = vpop.xlane.xlu0 %146
    %148 = vadd.xlane.f32.xlu0 %v143
    %v149 = vpop.xlane.xlu0 %148
    %150 = vadd.xlane.f32.xlu0 %v144
    %v151 = vpop.xlane.xlu0 %150
    %152 = vadd.xlane.f32.xlu0 %v145
    %v153 = vpop.xlane.xlu0 %152
    %v154 = vmul.f32 %v147, %v137
    %v155 = vmul.f32 %v149, %v137
    %v156 = vmul.f32 %v151, %v137
    %v157 = vmul.f32 %v153, %v137
    %v158 = vmul.f32 %v138, %v138
    %v159 = vmul.f32 %v139, %v139
    %v160 = vmul.f32 %v140, %v140
    %v161 = vmul.f32 %v141, %v141
    %v162 = vsub.f32 %v154, %v158
    %v163 = vsub.f32 %v155, %v159
    %v164 = vsub.f32 %v156, %v160
    %v165 = vsub.f32 %v157, %v161
    %v166 = vadd.f32 %v162, 1e-05
    %v167 = vadd.f32 %v163, 1e-05
    %v168 = vadd.f32 %v164, 1e-05
    %v169 = vadd.f32 %v165, 1e-05
    %v170 = vrsqrt.pop %v166
    %v171 = vrsqrt.pop %v167
    %v172 = vrsqrt.pop %v168
    %v173 = vrsqrt.pop %v169
    %v174 = vsub.f32 %v115, %v138
    %v175 = vsub.f32 %v118, %v139
    %v176 = vsub.f32 %v123, %v140
    %v177 = vsub.f32 %v126, %v141
    %v178 = vmul.f32 %v174, %v170
    %v179 = vmul.f32 %v175, %v171
    %v180 = vmul.f32 %v176, %v172
    %v181 = vmul.f32 %v177, %v173
    %v182 = vlaneseq
    %v183 = vshrl.u32 %v182, 7
    %v184 = vsub.s32 1, %v183
    %v185 = vrot.slane %v42, %v184
    %v186 = vmul.f32 %v178, %v185
    %v187 = vmul.f32 %v179, %v185
    %v188 = vmul.f32 %v180, %v185
    %v189 = vmul.f32 %v181, %v185
    %v190 = vlaneseq
    %v191 = vshrl.u32 %v190, 7
    %v192 = vsub.s32 2, %v191
    %v193 = vrot.slane %v42, %v192
    %v194 = vadd.f32 %v186, %v193
    %v195 = vadd.f32 %v187, %v193
    %v196 = vadd.f32 %v188, %v193
    %v197 = vadd.f32 %v189, %v193
    %v198 = vmax.f32 %v194, 0.0
    %v199 = vmax.f32 %v195, 0.0
    %v200 = vmax.f32 %v196, 0.0
    %v201 = vmax.f32 %v197, 0.0
    %v202 = vld [vmem:[%s5] sm:$0x7]
    %v203 = vpack.c.bf16 %v199, %v198
    %v204 = vpack.c.bf16 %v201, %v200
    %v205 = vld [vmem:[%s3] sm:$0xf]
    %v206 = vld [vmem:[%s3 + $0x4] sm:$0xf]
    %v207 = vld [vmem:[%s3 + $0x8] sm:$0xf]
    %v208 = vld [vmem:[%s3 + $0xc] sm:$0xf]
    %v209 = vld [vmem:[%s3 + $0x10] sm:$0xf]
    %v210 = vld [vmem:[%s3 + $0x14] sm:$0xf]
    %v211 = vld [vmem:[%s3 + $0x18] sm:$0xf]
    %v212 = vld [vmem:[%s3 + $0x1c] sm:$0xf]
    %v213 = vld [vmem:[%s3 + $0x20] sm:$0xf]
    %v214 = vld [vmem:[%s3 + $0x24] sm:$0xf]
    %v215 = vld [vmem:[%s3 + $0x28] sm:$0xf]
    %v216 = vld [vmem:[%s3 + $0x2c] sm:$0xf]
    %v217 = vld [vmem:[%s3 + $0x30] sm:$0xf]
    %v218 = vld [vmem:[%s3 + $0x34] sm:$0xf]
    %v219 = vld [vmem:[%s3 + $0x38] sm:$0xf]
    %v220 = vld [vmem:[%s3 + $0x3c] sm:$0xf]
    %v221 = vld [vmem:[%s4] sm:$0xf]
    %v222 = vld [vmem:[%s4 + $0x4] sm:$0xf]
    %v223 = vld [vmem:[%s4 + $0x8] sm:$0xf]
    %v227 = vunpack.c.l.b16 %v221
    %v228 = vunpack.c.l.b16 %v222
    %v229 = vunpack.c.l.b16 %v223
    %v230 = vpack.c.b16 %v228, %v227
    %v231 = vpack.c.b16 %v229, %v229
    %v234 = vsel %vm76, %v231, 0
    %236 = vmatprep.subr.bf16.mxu0 0
    %237 = vmatpush1.bf16.msra.mxu0 %v230
    %238 = vmatprep.subr.bf16.mxu0 0
    %239 = vmatpush1.bf16.msra.mxu0 %v234
    %240 = vmatprep.subr.bf16.mxu0 0
    %241 = vmatpush1.bf16.msra.mxu0 0
    %242 = vmatprep.subr.bf16.mxu0 0
    %243 = vmatpush1.bf16.msra.mxu0 0
    %244 = vmatprep.subr.bf16.mxu0 0
    %245 = vmatpush1.bf16.msra.mxu0 0
    %246 = vmatprep.subr.bf16.mxu0 0
    %247 = vmatpush1.bf16.msra.mxu0 0
    %248 = vmatprep.subr.bf16.mxu0 0
    %249 = vmatpush1.bf16.msra.mxu0 0
    %250 = vmatprep.subr.bf16.mxu0 0
    %251 = vmatpush1.bf16.msra.mxu0 0
    %252 = vmatprep.subr.bf16.mxu0 0
    %253 = vmatpush1.bf16.msra.mxu0 0
    %254 = vmatprep.subr.bf16.mxu0 0
    %255 = vmatpush1.bf16.msra.mxu0 0
    %256 = vmatprep.subr.bf16.mxu0 0
    %257 = vmatpush1.bf16.msra.mxu0 0
    %258 = vmatprep.subr.bf16.mxu0 0
    %259 = vmatpush1.bf16.msra.mxu0 0
    %260 = vmatprep.subr.bf16.mxu0 0
    %261 = vmatpush1.bf16.msra.mxu0 0
    %262 = vmatprep.subr.bf16.mxu0 0
    %263 = vmatpush1.bf16.msra.mxu0 0
    %264 = vmatprep.subr.bf16.mxu0 0
    %265 = vmatpush1.bf16.msra.mxu0 0
    %266 = vmatprep.subr.bf16.mxu0 0
    %267 = vmatpush1.bf16.msra.mxu0 0
    %268 = vmatprep.mubr.bf16.mxu0 0
    %269 = vmatmul.mubr.bf16.gmra.mrb[0].mxu0 %v71
    %v270 = vpop.f32.mrb[0].mxu0
    %v271 = vadd.f32 0.0, %v270
    %v272 = vpop.f32.mrb[0].mxu0
    %v273 = vpop.f32.mrb[0].mxu0
    %v274 = vadd.f32 0.0, %v273
    %v275 = vpop.f32.mrb[0].mxu0
    %276 = vmatprep.mubr.bf16.mxu0 0
    %277 = vmatmul.mubr.bf16.gmra.mrb[0].mxu0 %v74
    %v278 = vpop.f32.mrb[0].mxu0
    %v279 = vadd.f32 0.0, %v278
    %v280 = vpop.f32.mrb[0].mxu0
    %v281 = vpop.f32.mrb[0].mxu0
    %v282 = vadd.f32 0.0, %v281
    %v283 = vpop.f32.mrb[0].mxu0
    %284 = vdwg.mxu0
    %v301 = vunpack.c.l.b16 %v205
    %v302 = vunpack.c.l.b16 %v206
    %v303 = vunpack.c.l.b16 %v207
    %v304 = vunpack.c.l.b16 %v208
    %v305 = vunpack.c.l.b16 %v209
    %v306 = vunpack.c.l.b16 %v210
    %v307 = vunpack.c.l.b16 %v211
    %v308 = vunpack.c.l.b16 %v212
    %v309 = vunpack.c.l.b16 %v213
    %v310 = vunpack.c.l.b16 %v214
    %v311 = vunpack.c.l.b16 %v215
    %v312 = vunpack.c.l.b16 %v216
    %v313 = vunpack.c.l.b16 %v217
    %v314 = vunpack.c.l.b16 %v218
    %v315 = vunpack.c.l.b16 %v219
    %v316 = vunpack.c.l.b16 %v220
    %v317 = vpack.c.b16 %v302, %v301
    %v318 = vpack.c.b16 %v304, %v303
    %v319 = vpack.c.b16 %v306, %v305
    %v320 = vpack.c.b16 %v308, %v307
    %v321 = vpack.c.b16 %v310, %v309
    %v322 = vpack.c.b16 %v312, %v311
    %v323 = vpack.c.b16 %v314, %v313
    %v324 = vpack.c.b16 %v316, %v315
    %333 = vmatprep.subr.bf16.mxu0 0
    %334 = vmatpush1.bf16.msra.mxu0 %v317
    %335 = vmatprep.subr.bf16.mxu0 0
    %336 = vmatpush1.bf16.msra.mxu0 %v318
    %337 = vmatprep.subr.bf16.mxu0 0
    %338 = vmatpush1.bf16.msra.mxu0 %v319
    %339 = vmatprep.subr.bf16.mxu0 0
    %340 = vmatpush1.bf16.msra.mxu0 %v320
    %341 = vmatprep.subr.bf16.mxu0 0
    %342 = vmatpush1.bf16.msra.mxu0 %v321
    %343 = vmatprep.subr.bf16.mxu0 0
    %344 = vmatpush1.bf16.msra.mxu0 %v322
    %345 = vmatprep.subr.bf16.mxu0 0
    %346 = vmatpush1.bf16.msra.mxu0 %v323
    %347 = vmatprep.subr.bf16.mxu0 0
    %348 = vmatpush1.bf16.msra.mxu0 %v324
    %349 = vmatprep.subr.bf16.mxu0 0
    %350 = vmatpush1.bf16.msra.mxu0 0
    %351 = vmatprep.subr.bf16.mxu0 0
    %352 = vmatpush1.bf16.msra.mxu0 0
    %353 = vmatprep.subr.bf16.mxu0 0
    %354 = vmatpush1.bf16.msra.mxu0 0
    %355 = vmatprep.subr.bf16.mxu0 0
    %356 = vmatpush1.bf16.msra.mxu0 0
    %357 = vmatprep.subr.bf16.mxu0 0
    %358 = vmatpush1.bf16.msra.mxu0 0
    %359 = vmatprep.subr.bf16.mxu0 0
    %360 = vmatpush1.bf16.msra.mxu0 0
    %361 = vmatprep.subr.bf16.mxu0 0
    %362 = vmatpush1.bf16.msra.mxu0 0
    %363 = vmatprep.subr.bf16.mxu0 0
    %364 = vmatpush1.bf16.msra.mxu0 0
    %365 = vmatprep.mubr.bf16.mxu0 0
    %366 = vmatmul.mubr.bf16.gmra.mrb[0].mxu0 %v203
    %v367 = vpop.f32.mrb[0].mxu0
    %v368 = vadd.f32 %v271, %v367
    %v369 = vpop.f32.mrb[0].mxu0
    %v370 = vpop.f32.mrb[0].mxu0
    %v371 = vadd.f32 %v274, %v370
    %v372 = vpop.f32.mrb[0].mxu0
    %373 = vmatprep.mubr.bf16.mxu0 0
    %374 = vmatmul.mubr.bf16.gmra.mrb[0].mxu0 %v204
    %v375 = vpop.f32.mrb[0].mxu0
    %v376 = vadd.f32 %v279, %v375
    %v377 = vpop.f32.mrb[0].mxu0
    %v378 = vpop.f32.mrb[0].mxu0
    %v379 = vadd.f32 %v282, %v378
    %v380 = vpop.f32.mrb[0].mxu0
    %381 = vdwg.mxu0
    %v382 = vlaneseq
    %v383 = vshrl.u32 %v382, 7
    %v384 = vsub.s32 0, %v383
    %v385 = vrot.slane %v202, %v384
    %v386 = vadd.f32 %v368, %v385
    %v387 = vadd.f32 %v371, %v385
    %v388 = vadd.f32 %v376, %v385
    %v389 = vadd.f32 %v379, %v385
    %vm390 = vcmask 523264
    %v391 = vsel %vm390, %v386, 0.0
    %392 = vadd.xlane.f32.xlu0 %v391
    %v393 = vpop.xlane.xlu0 %392
    %v394 = vsel %vm390, %v387, 0.0
    %395 = vadd.xlane.f32.xlu0 %v394
    %v396 = vpop.xlane.xlu0 %395
    %v397 = vsel %vm390, %v388, 0.0
    %398 = vadd.xlane.f32.xlu0 %v397
    %v399 = vpop.xlane.xlu0 %398
    %v400 = vsel %vm390, %v389, 0.0
    %401 = vadd.xlane.f32.xlu0 %v400
    %v402 = vpop.xlane.xlu0 %401
    %v403 = vrcp.pop 64.0
    %v404 = vmul.f32 %v393, %v403
    %v405 = vmul.f32 %v396, %v403
    %v406 = vmul.f32 %v399, %v403
    %v407 = vmul.f32 %v402, %v403
    %v408 = vmul.f32 %v386, %v386
    %v409 = vmul.f32 %v387, %v387
    %v410 = vmul.f32 %v388, %v388
    %v411 = vmul.f32 %v389, %v389
    %v412 = vsel %vm390, %v408, 0.0
    %413 = vadd.xlane.f32.xlu0 %v412
    %v414 = vpop.xlane.xlu0 %413
    %v415 = vsel %vm390, %v409, 0.0
    %416 = vadd.xlane.f32.xlu0 %v415
    %v417 = vpop.xlane.xlu0 %416
    %v418 = vsel %vm390, %v410, 0.0
    %419 = vadd.xlane.f32.xlu0 %v418
    %v420 = vpop.xlane.xlu0 %419
    %v421 = vsel %vm390, %v411, 0.0
    %422 = vadd.xlane.f32.xlu0 %v421
    %v423 = vpop.xlane.xlu0 %422
    %v424 = vmul.f32 %v414, %v403
    %v425 = vmul.f32 %v417, %v403
    %v426 = vmul.f32 %v420, %v403
    %v427 = vmul.f32 %v423, %v403
    %v428 = vmul.f32 %v404, %v404
    %v429 = vmul.f32 %v405, %v405
    %v430 = vmul.f32 %v406, %v406
    %v431 = vmul.f32 %v407, %v407
    %v432 = vsub.f32 %v424, %v428
    %v433 = vsub.f32 %v425, %v429
    %v434 = vsub.f32 %v426, %v430
    %v435 = vsub.f32 %v427, %v431
    %v436 = vadd.f32 %v432, 1e-05
    %v437 = vadd.f32 %v433, 1e-05
    %v438 = vadd.f32 %v434, 1e-05
    %v439 = vadd.f32 %v435, 1e-05
    %v440 = vrsqrt.pop %v436
    %v441 = vrsqrt.pop %v437
    %v442 = vrsqrt.pop %v438
    %v443 = vrsqrt.pop %v439
    %v444 = vsub.f32 %v386, %v404
    %v445 = vsub.f32 %v387, %v405
    %v446 = vsub.f32 %v388, %v406
    %v447 = vsub.f32 %v389, %v407
    %v448 = vmul.f32 %v444, %v440
    %v449 = vmul.f32 %v445, %v441
    %v450 = vmul.f32 %v446, %v442
    %v451 = vmul.f32 %v447, %v443
    %v452 = vlaneseq
    %v453 = vshrl.u32 %v452, 7
    %v454 = vsub.s32 1, %v453
    %v455 = vrot.slane %v202, %v454
    %v456 = vmul.f32 %v448, %v455
    %v457 = vmul.f32 %v449, %v455
    %v458 = vmul.f32 %v450, %v455
    %v459 = vmul.f32 %v451, %v455
    %v460 = vlaneseq
    %v461 = vshrl.u32 %v460, 7
    %v462 = vsub.s32 2, %v461
    %v463 = vrot.slane %v202, %v462
    %v464 = vadd.f32 %v456, %v463
    %v465 = vadd.f32 %v457, %v463
    %v466 = vadd.f32 %v458, %v463
    %v467 = vadd.f32 %v459, %v463
    %v468 = vmax.f32 %v464, 0.0
    %v469 = vmax.f32 %v465, 0.0
    %v470 = vmax.f32 %v466, 0.0
    %v471 = vmax.f32 %v467, 0.0
    %v472 = vld [vmem:[%s7] sm:$0x7]
    %v473 = vpack.c.bf16 %v469, %v468
    %v474 = vpack.c.bf16 %v471, %v470
    %v475 = vld [vmem:[%s6] sm:$0xf]
    %v476 = vld [vmem:[%s6 + $0x4] sm:$0xf]
    %v477 = vld [vmem:[%s6 + $0x8] sm:$0xf]
    %v478 = vld [vmem:[%s6 + $0xc] sm:$0xf]
    %v479 = vld [vmem:[%s6 + $0x10] sm:$0xf]
    %v480 = vld [vmem:[%s6 + $0x14] sm:$0xf]
    %v481 = vld [vmem:[%s6 + $0x18] sm:$0xf]
    %v482 = vld [vmem:[%s6 + $0x1c] sm:$0xf]
    %v483 = vlaneseq
    %v484 = vshrl.u32 %v483, 7
    %v485 = vsub.s32 0, %v484
    %v486 = vrot.slane %v472, %v485
    %v495 = vunpack.c.l.b16 %v475
    %v496 = vunpack.c.l.b16 %v476
    %v497 = vunpack.c.l.b16 %v477
    %v498 = vunpack.c.l.b16 %v478
    %v499 = vunpack.c.l.b16 %v479
    %v500 = vunpack.c.l.b16 %v480
    %v501 = vunpack.c.l.b16 %v481
    %v502 = vunpack.c.l.b16 %v482
    %v503 = vpack.c.b16 %v496, %v495
    %v504 = vpack.c.b16 %v498, %v497
    %v505 = vpack.c.b16 %v500, %v499
    %v506 = vpack.c.b16 %v502, %v501
    %v512 = vsel %vm390, %v473, 0
    %v515 = vsel %vm390, %v474, 0
    %517 = vmatprep.subr.bf16.mxu0 0
    %518 = vmatpush1.bf16.msra.mxu0 %v503
    %519 = vmatprep.subr.bf16.mxu0 0
    %520 = vmatpush1.bf16.msra.mxu0 %v504
    %521 = vmatprep.subr.bf16.mxu0 0
    %522 = vmatpush1.bf16.msra.mxu0 %v505
    %523 = vmatprep.subr.bf16.mxu0 0
    %524 = vmatpush1.bf16.msra.mxu0 %v506
    %525 = vmatprep.subr.bf16.mxu0 0
    %526 = vmatpush1.bf16.msra.mxu0 0
    %527 = vmatprep.subr.bf16.mxu0 0
    %528 = vmatpush1.bf16.msra.mxu0 0
    %529 = vmatprep.subr.bf16.mxu0 0
    %530 = vmatpush1.bf16.msra.mxu0 0
    %531 = vmatprep.subr.bf16.mxu0 0
    %532 = vmatpush1.bf16.msra.mxu0 0
    %533 = vmatprep.subr.bf16.mxu0 0
    %534 = vmatpush1.bf16.msra.mxu0 0
    %535 = vmatprep.subr.bf16.mxu0 0
    %536 = vmatpush1.bf16.msra.mxu0 0
    %537 = vmatprep.subr.bf16.mxu0 0
    %538 = vmatpush1.bf16.msra.mxu0 0
    %539 = vmatprep.subr.bf16.mxu0 0
    %540 = vmatpush1.bf16.msra.mxu0 0
    %541 = vmatprep.subr.bf16.mxu0 0
    %542 = vmatpush1.bf16.msra.mxu0 0
    %543 = vmatprep.subr.bf16.mxu0 0
    %544 = vmatpush1.bf16.msra.mxu0 0
    %545 = vmatprep.subr.bf16.mxu0 0
    %546 = vmatpush1.bf16.msra.mxu0 0
    %547 = vmatprep.subr.bf16.mxu0 0
    %548 = vmatpush1.bf16.msra.mxu0 0
    %549 = vmatprep.mubr.bf16.mxu0 0
    %550 = vmatmul.mubr.bf16.gmra.mrb[0].mxu0 %v512
    %v551 = vpop.f32.mrb[0].mxu0
    %v552 = vadd.f32 %v486, %v551
    %v553 = vpop.f32.mrb[0].mxu0
    %v554 = vpop.f32.mrb[0].mxu0
    %v555 = vadd.f32 %v486, %v554
    %v556 = vpop.f32.mrb[0].mxu0
    %557 = vmatprep.mubr.bf16.mxu0 0
    %558 = vmatmul.mubr.bf16.gmra.mrb[0].mxu0 %v515
    %v559 = vpop.f32.mrb[0].mxu0
    %v560 = vadd.f32 %v486, %v559
    %v561 = vpop.f32.mrb[0].mxu0
    %v562 = vpop.f32.mrb[0].mxu0
    %v563 = vadd.f32 %v486, %v562
    %v564 = vpop.f32.mrb[0].mxu0
    %565 = vdwg.mxu0
    %vm566 = vcmask 261120
    %v567 = vsel %vm566, %v552, 0.0
    %568 = vadd.xlane.f32.xlu0 %v567
    %v569 = vpop.xlane.xlu0 %568
    %v570 = vsel %vm566, %v555, 0.0
    %571 = vadd.xlane.f32.xlu0 %v570
    %v572 = vpop.xlane.xlu0 %571
    %v573 = vsel %vm566, %v560, 0.0
    %574 = vadd.xlane.f32.xlu0 %v573
    %v575 = vpop.xlane.xlu0 %574
    %v576 = vsel %vm566, %v563, 0.0
    %577 = vadd.xlane.f32.xlu0 %v576
    %v578 = vpop.xlane.xlu0 %577
    %v579 = vrcp.pop 32.0
    %v580 = vmul.f32 %v569, %v579
    %v581 = vmul.f32 %v572, %v579
    %v582 = vmul.f32 %v575, %v579
    %v583 = vmul.f32 %v578, %v579
    %v584 = vmul.f32 %v552, %v552
    %v585 = vmul.f32 %v555, %v555
    %v586 = vmul.f32 %v560, %v560
    %v587 = vmul.f32 %v563, %v563
    %v588 = vsel %vm566, %v584, 0.0
    %589 = vadd.xlane.f32.xlu0 %v588
    %v590 = vpop.xlane.xlu0 %589
    %v591 = vsel %vm566, %v585, 0.0
    %592 = vadd.xlane.f32.xlu0 %v591
    %v593 = vpop.xlane.xlu0 %592
    %v594 = vsel %vm566, %v586, 0.0
    %595 = vadd.xlane.f32.xlu0 %v594
    %v596 = vpop.xlane.xlu0 %595
    %v597 = vsel %vm566, %v587, 0.0
    %598 = vadd.xlane.f32.xlu0 %v597
    %v599 = vpop.xlane.xlu0 %598
    %v600 = vmul.f32 %v590, %v579
    %v601 = vmul.f32 %v593, %v579
    %v602 = vmul.f32 %v596, %v579
    %v603 = vmul.f32 %v599, %v579
    %v604 = vmul.f32 %v580, %v580
    %v605 = vmul.f32 %v581, %v581
    %v606 = vmul.f32 %v582, %v582
    %v607 = vmul.f32 %v583, %v583
    %v608 = vsub.f32 %v600, %v604
    %v609 = vsub.f32 %v601, %v605
    %v610 = vsub.f32 %v602, %v606
    %v611 = vsub.f32 %v603, %v607
    %v612 = vadd.f32 %v608, 1e-05
    %v613 = vadd.f32 %v609, 1e-05
    %v614 = vadd.f32 %v610, 1e-05
    %v615 = vadd.f32 %v611, 1e-05
    %v616 = vrsqrt.pop %v612
    %v617 = vrsqrt.pop %v613
    %v618 = vrsqrt.pop %v614
    %v619 = vrsqrt.pop %v615
    %v620 = vsub.f32 %v552, %v580
    %v621 = vsub.f32 %v555, %v581
    %v622 = vsub.f32 %v560, %v582
    %v623 = vsub.f32 %v563, %v583
    %v624 = vmul.f32 %v620, %v616
    %v625 = vmul.f32 %v621, %v617
    %v626 = vmul.f32 %v622, %v618
    %v627 = vmul.f32 %v623, %v619
    %v628 = vlaneseq
    %v629 = vshrl.u32 %v628, 7
    %v630 = vsub.s32 1, %v629
    %v631 = vrot.slane %v472, %v630
    %v632 = vmul.f32 %v624, %v631
    %v633 = vmul.f32 %v625, %v631
    %v634 = vmul.f32 %v626, %v631
    %v635 = vmul.f32 %v627, %v631
    %v636 = vlaneseq
    %v637 = vshrl.u32 %v636, 7
    %v638 = vsub.s32 2, %v637
    %v639 = vrot.slane %v472, %v638
    %v640 = vadd.f32 %v632, %v639
    %v641 = vadd.f32 %v633, %v639
    %v642 = vadd.f32 %v634, %v639
    %v643 = vadd.f32 %v635, %v639
    %v644 = vmax.f32 %v640, 0.0
    %v645 = vmax.f32 %v641, 0.0
    %v646 = vmax.f32 %v642, 0.0
    %v647 = vmax.f32 %v643, 0.0
    %v648 = vld [vmem:[%s8] sm:$0x1]
    %v649 = vpack.c.bf16 %v645, %v644
    %v650 = vpack.c.bf16 %v647, %v646
    %s651 = sld [smem:[#allocation2]]
    %v652 = vstv %s651
    %v654 = vsel %vm566, %v648, 0
    %v657 = vsel %vm566, %v649, 0
    %v660 = vsel %vm566, %v650, 0
    %662 = vmatprep.subr.bf16.mxu0 0
    %663 = vmatpush1.bf16.xpose.msra.mxu0 %v657
    %664 = vmatprep.subr.bf16.mxu0 0
    %665 = vmatpush1.bf16.xpose.msra.mxu0 %v660
    %666 = vmatprep.subr.bf16.mxu0 0
    %667 = vmatpush1.bf16.xpose.msra.mxu0 0
    %668 = vmatprep.subr.bf16.mxu0 0
    %669 = vmatpush1.bf16.xpose.msra.mxu0 0
    %670 = vmatprep.subr.bf16.mxu0 0
    %671 = vmatpush1.bf16.xpose.msra.mxu0 0
    %672 = vmatprep.subr.bf16.mxu0 0
    %673 = vmatpush1.bf16.xpose.msra.mxu0 0
    %674 = vmatprep.subr.bf16.mxu0 0
    %675 = vmatpush1.bf16.xpose.msra.mxu0 0
    %676 = vmatprep.subr.bf16.mxu0 0
    %677 = vmatpush1.bf16.xpose.msra.mxu0 0
    %678 = vmatprep.subr.bf16.mxu0 0
    %679 = vmatpush1.bf16.xpose.msra.mxu0 0
    %680 = vmatprep.subr.bf16.mxu0 0
    %681 = vmatpush1.bf16.xpose.msra.mxu0 0
    %682 = vmatprep.subr.bf16.mxu0 0
    %683 = vmatpush1.bf16.xpose.msra.mxu0 0
    %684 = vmatprep.subr.bf16.mxu0 0
    %685 = vmatpush1.bf16.xpose.msra.mxu0 0
    %686 = vmatprep.subr.bf16.mxu0 0
    %687 = vmatpush1.bf16.xpose.msra.mxu0 0
    %688 = vmatprep.subr.bf16.mxu0 0
    %689 = vmatpush1.bf16.xpose.msra.mxu0 0
    %690 = vmatprep.subr.bf16.mxu0 0
    %691 = vmatpush1.bf16.xpose.msra.mxu0 0
    %692 = vmatprep.subr.bf16.mxu0 0
    %693 = vmatpush1.bf16.xpose.msra.mxu0 0
    %694 = vmatprep.mubr.bf16.mxu0 0
    %695 = vmatmul.mubr.bf16.gmra.mrb[0].mxu0 %v654
    %v696 = vpop.f32.mrb[0].mxu0
    %v697 = vadd.f32 %v652, %v696
    %v698 = vpop.f32.mrb[0].mxu0
    %v699 = vpop.f32.mrb[0].mxu0
    %v700 = vpop.f32.mrb[0].mxu0
    %701 = vdwg.mxu0
    %vm702 = vcmask 253952
    %703 = vst.msk [vmem:[#allocation3] sm:$0x1] %vm702, %v697
    // Predicated region
    $region42: #{tpu_custom_call.1} parent=1 // pred_check
      _
    $region43: #{tpu_custom_call.1} parent=1 // pred_check_branch
      %705 = sbr.rel (0) target = $region45
    $region44: #{tpu_custom_call.1} parent=1 // pred_region
      %s707 = ssub.s32 16, 16
      %708 = vsyncadd [#allocation4], %s707
      %s710 = sshll.u32 [#allocation3], 4
      %s711 = int_to_ptr.vmem [resolvable:$true] %s710
      %713 = dma.vmem_to_hbm [thread:$0]  %s711, 16, %s10, [#allocation4]
    $region45: #{tpu_custom_call.1} parent=1 // pred_fallthru
      _
    // Predicated region
    $region46: #{tpu_custom_call.1} parent=1 // pred_check
      _
    $region47: #{tpu_custom_call.1} parent=1 // pred_check_branch
      %715 = sbr.rel (0) target = $region49
    $region48: #{tpu_custom_call.1} parent=1 // pred_region
      %716 = dma.done [#allocation4], 16
    $region49: #{tpu_custom_call.1} parent=1 // pred_fallthru
      _
    %717 = vsyncpa [#allocation4], 1

</llo_original>
